<compile_context>
chip_gen: v7x
topology: tpu7x:2x2x1
jax: 0.10.0
libtpu: 0.0.40
codegen_flags: <defaults>
</compile_context>

<pallas_src>
import functools
import math

import jax
import jax.numpy as jnp
from jax.experimental import pallas as pl
from jax.experimental.pallas import tpu as pltpu

GAMMA = 2.0
ALPHA = 0.25


def _focal_loss_kernel(x_ref, t_ref, w_ref, o_ref, *, gamma, alpha):
    # x/t/o: (TM, L) lane-dense tiles; w: (TM, S) anchor weights, S = L // C.
    x = x_ref[...].astype(jnp.float32)
    t = t_ref[...].astype(jnp.float32)
    w = w_ref[...].astype(jnp.float32)

    lanes = x.shape[1]
    s = w.shape[1]
    c = lanes // s

    # Expand anchor weights over the class factor: W[r, l] = w[r, l // C].
    # Built as a 0/1 (S, L) matrix and applied on the MXU (idle otherwise);
    # exactly one nonzero per column, so the result is exact.
    row = jax.lax.broadcasted_iota(jnp.int32, (s, lanes), 0)
    col = jax.lax.broadcasted_iota(jnp.int32, (s, lanes), 1)
    lo = row * c
    expand = jnp.logical_and(col >= lo, col < lo + c).astype(jnp.float32)
    w_full = jnp.dot(w, expand, preferred_element_type=jnp.float32)

    # One transcendental shared by the sigmoid and the stable BCE term.
    e = jnp.exp(-jnp.abs(x))
    inv = 1.0 / (1.0 + e)
    sig = jnp.where(x >= 0.0, inv, e * inv)       # == sigmoid(x), stable

    alpha_w = t * alpha + (1.0 - t) * (1.0 - alpha)
    pt = t * (1.0 - sig) + (1.0 - t) * sig
    if gamma == 2.0:
        pt_pow = pt * pt                          # avoid exp(2*log(pt))
    elif gamma == 1.0:
        pt_pow = pt
    else:
        pt_pow = jnp.power(pt, gamma)
    focal_w = alpha_w * pt_pow

    # max(x, 0) - x*t + log1p(exp(-|x|))
    bce = jnp.maximum(x, 0.0) - x * t + jnp.log1p(e)

    o_ref[...] = (focal_w * bce * w_full).astype(o_ref.dtype)


def sigmoid_focal_classification_loss(logits, targets, weights,
                                      gamma=GAMMA, alpha=ALPHA):
    """logits, targets: (B, A, C) float; weights: (B, A) float.

    Returns (B, A, C) weighted focal loss (no reduction)."""
    B, A, C = logits.shape
    assert targets.shape == (B, A, C)
    assert weights.shape == (B, A)
    out_dtype = logits.dtype

    total = B * A * C

    # Lane width: multiple of lcm(C, 128), targeting ~1024 lanes.
    base = (C * 128) // math.gcd(C, 128)
    lanes = base * max(1, 1024 // base)
    s = lanes // C

    m = pl.cdiv(total, lanes)
    pad = m * lanes - total

    x = logits.reshape(-1)
    t = targets.reshape(-1)
    w = weights.reshape(-1)
    if pad:
        x = jnp.pad(x, (0, pad))
        t = jnp.pad(t, (0, pad))
    w_pad = m * s - B * A
    if w_pad:
        w = jnp.pad(w, (0, w_pad))

    x = x.reshape(m, lanes)
    t = t.reshape(m, lanes)
    w = w.reshape(m, s)

    # ~1 MiB f32 per data tile; block rows are a multiple of 8 sublanes or the
    # full (small) row count. Fits default scoped VMEM on v5e/v6e/v7x with
    # double-buffering of 3 inputs + 1 output.
    tm = max(8, ((256 * 1024) // lanes) // 8 * 8)
    tm = min(tm, m)
    grid = (pl.cdiv(m, tm),)

    data_spec = pl.BlockSpec((tm, lanes), lambda i: (i, 0))
    w_spec = pl.BlockSpec((tm, s), lambda i: (i, 0))

    out = pl.pallas_call(
        functools.partial(_focal_loss_kernel, gamma=gamma, alpha=alpha),
        out_shape=jax.ShapeDtypeStruct((m, lanes), out_dtype),
        grid=grid,
        in_specs=[data_spec, data_spec, w_spec],
        out_specs=data_spec,
        compiler_params=pltpu.CompilerParams(
            dimension_semantics=("parallel",)),
    )(x, t, w)

    out = out.reshape(-1)
    if pad:
        out = out[:total]
    return out.reshape(B, A, C)


def _reference(logits, targets, weights, gamma=GAMMA, alpha=ALPHA):
    pred_sigmoid = jax.nn.sigmoid(logits)
    alpha_weight = targets * alpha + (1 - targets) * (1 - alpha)
    pt = targets * (1.0 - pred_sigmoid) + (1.0 - targets) * pred_sigmoid
    focal_weight = alpha_weight * jnp.power(pt, gamma)
    bce = (jnp.maximum(logits, 0.0) - logits * targets
           + jnp.log1p(jnp.exp(-jnp.abs(logits))))
    return focal_weight * bce * weights[..., None]


if __name__ == "__main__":
    key = jax.random.PRNGKey(0)
    k1, k2, k3 = jax.random.split(key, 3)

    B, A, C = 2, 128, 8  # batch, anchors, classes
    logits = jax.random.normal(k1, (B, A, C), dtype=jnp.float32) * 3.0
    cls = jax.random.randint(k2, (B, A), 0, C)
    targets = jax.nn.one_hot(cls, C, dtype=jnp.float32)
    weights = jax.random.uniform(k3, (B, A), dtype=jnp.float32)

    out = sigmoid_focal_classification_loss(logits, targets, weights)
    out = jax.block_until_ready(out)

    ref = _reference(logits, targets, weights)
    assert out.shape == (B, A, C)
    assert jnp.allclose(out, ref, atol=1e-5, rtol=1e-5), "mismatch vs reference"

    print("KERNEL_OK")
</pallas_src>

<mosaic_0001>
module attributes {stable_mosaic.version = 11 : i64} {
  func.func @_focal_loss_kernel(%arg0: i32, %arg1: memref<2x1024xf32, #tpu.memory_space<vmem>>, %arg2: memref<2x1024xf32, #tpu.memory_space<vmem>>, %arg3: memref<2x128xf32, #tpu.memory_space<vmem>>, %arg4: memref<2x1024xf32, #tpu.memory_space<vmem>>) attributes {dimension_semantics = [#tpu.dimension_semantics<parallel>], iteration_bounds = array<i64: 1>, scalar_prefetch = 0 : i64, scratch_operands = 0 : i64, tpu.core_type = #tpu.core_type<tc>, window_params = [{transform_indices = @transform_0, window_bounds = array<i64: 2, 1024>}, {transform_indices = @transform_1, window_bounds = array<i64: 2, 1024>}, {transform_indices = @transform_2, window_bounds = array<i64: 2, 128>}, {transform_indices = @transform_3, window_bounds = array<i64: 2, 1024>}]} {
    %c0 = arith.constant 0 : index
    %c0_0 = arith.constant 0 : index
    %0 = vector.load %arg1[%c0, %c0_0] : memref<2x1024xf32, #tpu.memory_space<vmem>>, vector<2x1024xf32>
    %c0_1 = arith.constant 0 : index
    %c0_2 = arith.constant 0 : index
    %1 = vector.load %arg2[%c0_1, %c0_2] : memref<2x1024xf32, #tpu.memory_space<vmem>>, vector<2x1024xf32>
    %c0_3 = arith.constant 0 : index
    %c0_4 = arith.constant 0 : index
    %2 = vector.load %arg3[%c0_3, %c0_4] : memref<2x128xf32, #tpu.memory_space<vmem>>, vector<2x128xf32>
    %3 = tpu.iota {dimensions = array<i32: 0>} : vector<128x1024xi32>
    %4 = tpu.iota {dimensions = array<i32: 1>} : vector<128x1024xi32>
    %c8_i32 = arith.constant 8 : i32
    %5 = vector.broadcast %c8_i32 : i32 to vector<128x1024xi32>
    %6 = arith.muli %3, %5 : vector<128x1024xi32>
    %7 = arith.cmpi sge, %4, %6 : vector<128x1024xi32>
    %c8_i32_5 = arith.constant 8 : i32
    %8 = vector.broadcast %c8_i32_5 : i32 to vector<128x1024xi32>
    %9 = arith.addi %6, %8 : vector<128x1024xi32>
    %10 = arith.cmpi slt, %4, %9 : vector<128x1024xi32>
    %11 = arith.andi %7, %10 : vector<128x1024xi1>
    %12 = arith.extui %11 : vector<128x1024xi1> to vector<128x1024xi32>
    %13 = arith.sitofp %12 : vector<128x1024xi32> to vector<128x1024xf32>
    %cst = arith.constant dense<0.000000e+00> : vector<2x1024xf32>
    %14 = tpu.matmul %2, %13, %cst {dimension_numbers = #tpu.dot_dimension_numbers<[1], [0], [0], [1], [0, 0, 1, 1], [], []>} : vector<2x128xf32>, vector<128x1024xf32>, vector<2x1024xf32> -> vector<2x1024xf32>
    %15 = math.absf %0 : vector<2x1024xf32>
    %cst_6 = arith.constant 0.000000e+00 : f32
    %16 = vector.broadcast %cst_6 : f32 to vector<2x1024xf32>
    %17 = arith.subf %16, %15 : vector<2x1024xf32>
    %18 = math.exp %17 : vector<2x1024xf32>
    %cst_7 = arith.constant 1.000000e+00 : f32
    %19 = vector.broadcast %cst_7 : f32 to vector<2x1024xf32>
    %20 = arith.addf %19, %18 : vector<2x1024xf32>
    %cst_8 = arith.constant 1.000000e+00 : f32
    %21 = vector.broadcast %cst_8 : f32 to vector<2x1024xf32>
    %22 = arith.divf %21, %20 : vector<2x1024xf32>
    %cst_9 = arith.constant 0.000000e+00 : f32
    %23 = vector.broadcast %cst_9 : f32 to vector<2x1024xf32>
    %24 = arith.cmpf oge, %0, %23 : vector<2x1024xf32>
    %25 = arith.mulf %18, %22 : vector<2x1024xf32>
    %26 = arith.select %24, %22, %25 : vector<2x1024xi1>, vector<2x1024xf32>
    %cst_10 = arith.constant 2.500000e-01 : f32
    %27 = vector.broadcast %cst_10 : f32 to vector<2x1024xf32>
    %28 = arith.mulf %1, %27 : vector<2x1024xf32>
    %cst_11 = arith.constant 1.000000e+00 : f32
    %29 = vector.broadcast %cst_11 : f32 to vector<2x1024xf32>
    %30 = arith.subf %29, %1 : vector<2x1024xf32>
    %cst_12 = arith.constant 7.500000e-01 : f32
    %31 = vector.broadcast %cst_12 : f32 to vector<2x1024xf32>
    %32 = arith.mulf %30, %31 : vector<2x1024xf32>
    %33 = arith.addf %28, %32 : vector<2x1024xf32>
    %cst_13 = arith.constant 1.000000e+00 : f32
    %34 = vector.broadcast %cst_13 : f32 to vector<2x1024xf32>
    %35 = arith.subf %34, %26 : vector<2x1024xf32>
    %36 = arith.mulf %1, %35 : vector<2x1024xf32>
    %cst_14 = arith.constant 1.000000e+00 : f32
    %37 = vector.broadcast %cst_14 : f32 to vector<2x1024xf32>
    %38 = arith.subf %37, %1 : vector<2x1024xf32>
    %39 = arith.mulf %38, %26 : vector<2x1024xf32>
    %40 = arith.addf %36, %39 : vector<2x1024xf32>
    %41 = arith.mulf %40, %40 : vector<2x1024xf32>
    %42 = arith.mulf %33, %41 : vector<2x1024xf32>
    %cst_15 = arith.constant 0.000000e+00 : f32
    %43 = vector.broadcast %cst_15 : f32 to vector<2x1024xf32>
    %44 = arith.maximumf %0, %43 : vector<2x1024xf32>
    %45 = arith.mulf %0, %1 : vector<2x1024xf32>
    %46 = arith.subf %44, %45 : vector<2x1024xf32>
    %47 = math.log1p %18 : vector<2x1024xf32>
    %48 = arith.addf %46, %47 : vector<2x1024xf32>
    %49 = arith.mulf %42, %48 : vector<2x1024xf32>
    %50 = arith.mulf %49, %14 : vector<2x1024xf32>
    %c0_16 = arith.constant 0 : index
    %c0_17 = arith.constant 0 : index
    %51 = vector.load %arg4[%c0_16, %c0_17] : memref<2x1024xf32, #tpu.memory_space<vmem>>, vector<2x1024xf32>
    tpu.vector_store %arg4[%c0_16, %c0_17], %50 {strides = array<i32>} : memref<2x1024xf32, #tpu.memory_space<vmem>>, vector<2x1024xf32>,
    return
  }
  func.func @transform_0(%arg0: i32) -> (i32, i32) {
    %c0_i32 = arith.constant 0 : i32
    %c0_i32_0 = arith.constant 0 : i32
    return %arg0, %c0_i32 : i32, i32
  }
  func.func @transform_1(%arg0: i32) -> (i32, i32) {
    %c0_i32 = arith.constant 0 : i32
    %c0_i32_0 = arith.constant 0 : i32
    return %arg0, %c0_i32 : i32, i32
  }
  func.func @transform_2(%arg0: i32) -> (i32, i32) {
    %c0_i32 = arith.constant 0 : i32
    %c0_i32_0 = arith.constant 0 : i32
    return %arg0, %c0_i32 : i32, i32
  }
  func.func @transform_3(%arg0: i32) -> (i32, i32) {
    %c0_i32 = arith.constant 0 : i32
    %c0_i32_0 = arith.constant 0 : i32
    return %arg0, %c0_i32 : i32, i32
  }
}

</mosaic_0001>

<llo_original>
// kernel: tpu_custom_call.1
$region0: #{tpu_custom_call.1}
  #allocation0 [shape = 'u32[]', space=smem, size = 0x4, offset = 0x4, fixed_abs, tag = 'smem constant byte address 0x4 - core index']
  #allocation1 [shape = 'u32[144,128]{1,0:T(1,128)}', space=vmem, size = 0x12000, scoped, tag = 'internal scratch']
  %s0 = inlined_call_operand.hbm [shape: f32[2,1024], index: 0, kind: input, shape index: {}]
  %s1 = inlined_call_operand.hbm [shape: f32[2,1024], index: 1, kind: input, shape index: {}]
  %s2 = inlined_call_operand.vmem [shape: f32[2,128], index: 2, kind: input, shape index: {}]
  %s3 = inlined_call_operand.hbm [shape: f32[2,1024], index: 3, kind: output, shape index: {}]
  %s4 = sld [smem:[#allocation0]]
  $region30: #{tpu_custom_call.1} parent=0
    _
  %s6 = ssub.s32 1, %s4
  %s7 = scalar_select 0, %s6, %s4
  $region1: #{tpu_custom_call.1} parent=0
    #allocation2 [shape = 'u8[8192]{0}', space=vmem, size = 0x2000, scoped, tag = 'input window, operand 0, single buffered']
    #allocation3 [shape = 's32[1]{0}', space=sflag, size = 0x4, scoped, tag = 'scoped memory for tpu_custom_call.1']
    #allocation4 [shape = 's32[1]{0}', space=sflag, size = 0x4, scoped, tag = 'scoped memory for tpu_custom_call.1']
    #allocation5 [shape = 'u8[8192]{0}', space=vmem, size = 0x2000, scoped, tag = 'input window, operand 1, single buffered']
    #allocation6 [shape = 's32[1]{0}', space=sflag, size = 0x4, scoped, tag = 'scoped memory for tpu_custom_call.1']
    #allocation7 [shape = 'u8[8192]{0}', space=vmem, size = 0x2000, scoped, tag = 'output window, operand 0, single buffered']
    %8 = vsyncpa [#allocation3], 0
    %9 = vsyncpa [#allocation6], 0
    %10 = vsyncpa [#allocation4], 0
    // Predicated region
    $region2: #{tpu_custom_call.1} parent=1 // pred_check
      _
    $region3: #{tpu_custom_call.1} parent=1 // pred_check_branch
      %12 = sbr.rel (0) target = $region5
    $region4: #{tpu_custom_call.1} parent=1 // pred_region
      %s14 = ssub.s32 256, 256
      %15 = vsyncadd [#allocation3], %s14
      %s17 = sshll.u32 [#allocation2], 4
      %s18 = int_to_ptr.vmem [resolvable:$true] %s17
      %20 = dma.hbm_to_vmem [thread:$0]  %s0, 256, %s18, [#allocation3]
    $region5: #{tpu_custom_call.1} parent=1 // pred_fallthru
      _
    // Predicated region
    $region6: #{tpu_custom_call.1} parent=1 // pred_check
      _
    $region7: #{tpu_custom_call.1} parent=1 // pred_check_branch
      %22 = sbr.rel (0) target = $region9
    $region8: #{tpu_custom_call.1} parent=1 // pred_region
      %s24 = ssub.s32 256, 256
      %25 = vsyncadd [#allocation6], %s24
      %s27 = sshll.u32 [#allocation5], 4
      %s28 = int_to_ptr.vmem [resolvable:$true] %s27
      %30 = dma.hbm_to_vmem [thread:$0]  %s1, 256, %s28, [#allocation6]
    $region9: #{tpu_custom_call.1} parent=1 // pred_fallthru
      _
    // Predicated region
    $region10: #{tpu_custom_call.1} parent=1 // pred_check
      _
    $region11: #{tpu_custom_call.1} parent=1 // pred_check_branch
      %32 = sbr.rel (0) target = $region13
    $region12: #{tpu_custom_call.1} parent=1 // pred_region
      _
    $region13: #{tpu_custom_call.1} parent=1 // pred_fallthru
      _
    // Predicated region
    $region14: #{tpu_custom_call.1} parent=1 // pred_check
      _
    $region15: #{tpu_custom_call.1} parent=1 // pred_check_branch
      %34 = sbr.rel (0) target = $region17
    $region16: #{tpu_custom_call.1} parent=1 // pred_region
      %35 = dma.done [#allocation3], 256
    $region17: #{tpu_custom_call.1} parent=1 // pred_fallthru
      _
    // Predicated region
    $region18: #{tpu_custom_call.1} parent=1 // pred_check
      _
    $region19: #{tpu_custom_call.1} parent=1 // pred_check_branch
      %37 = sbr.rel (0) target = $region21
    $region20: #{tpu_custom_call.1} parent=1 // pred_region
      %38 = dma.done [#allocation6], 256
    $region21: #{tpu_custom_call.1} parent=1 // pred_fallthru
      _
    %v39 = vld [vmem:[#allocation2] sm:$0xff]
    %v40 = vld [vmem:[#allocation2 + $0x8] sm:$0xff]
    %v41 = vld [vmem:[#allocation5] sm:$0xff]
    %v42 = vld [vmem:[#allocation5 + $0x8] sm:$0xff]
    %v43 = vld [vmem:[%s2] sm:$0x3]
    %v44 = vlaneseq
    %v45 = vshrl.u32 %v44, 7
    %v46 = vadd.s32 %v45, 8
    %v47 = vadd.s32 %v45, 16
    %v48 = vadd.s32 %v45, 24
    %v49 = vadd.s32 %v45, 32
    %v50 = vadd.s32 %v45, 40
    %v51 = vadd.s32 %v45, 48
    %v52 = vadd.s32 %v45, 56
    %v53 = vadd.s32 %v45, 64
    %v54 = vadd.s32 %v45, 72
    %v55 = vadd.s32 %v45, 80
    %v56 = vadd.s32 %v45, 88
    %v57 = vadd.s32 %v45, 96
    %v58 = vadd.s32 %v45, 104
    %v59 = vadd.s32 %v45, 112
    %v60 = vadd.s32 %v45, 120
    %v61 = vlaneseq
    %v62 = vand.u32 %v61, 127
    %v63 = vadd.s32 %v62, 128
    %v64 = vadd.s32 %v62, 256
    %v65 = vadd.s32 %v62, 384
    %v66 = vadd.s32 %v62, 512
    %v67 = vadd.s32 %v62, 640
    %v68 = vadd.s32 %v62, 768
    %v69 = vadd.s32 %v62, 896
    %v70 = vmul.u32 %v45, 8
    %v71 = vmul.u32 %v46, 8
    %v72 = vmul.u32 %v47, 8
    %v73 = vmul.u32 %v48, 8
    %v74 = vmul.u32 %v49, 8
    %v75 = vmul.u32 %v50, 8
    %v76 = vmul.u32 %v51, 8
    %v77 = vmul.u32 %v52, 8
    %v78 = vmul.u32 %v53, 8
    %v79 = vmul.u32 %v54, 8
    %v80 = vmul.u32 %v55, 8
    %v81 = vmul.u32 %v56, 8
    %v82 = vmul.u32 %v57, 8
    %v83 = vmul.u32 %v58, 8
    %v84 = vmul.u32 %v59, 8
    %v85 = vmul.u32 %v60, 8
    %vm86 = vcmp.ge.s32.totalorder %v62, %v70
    %vm87 = vcmp.ge.s32.totalorder %v63, %v70
    %vm88 = vcmp.ge.s32.totalorder %v64, %v70
    %vm89 = vcmp.ge.s32.totalorder %v65, %v70
    %vm90 = vcmp.ge.s32.totalorder %v66, %v70
    %vm91 = vcmp.ge.s32.totalorder %v67, %v70
    %vm92 = vcmp.ge.s32.totalorder %v68, %v70
    %vm93 = vcmp.ge.s32.totalorder %v69, %v70
    %vm94 = vcmp.ge.s32.totalorder %v62, %v71
    %vm95 = vcmp.ge.s32.totalorder %v63, %v71
    %vm96 = vcmp.ge.s32.totalorder %v64, %v71
    %vm97 = vcmp.ge.s32.totalorder %v65, %v71
    %vm98 = vcmp.ge.s32.totalorder %v66, %v71
    %vm99 = vcmp.ge.s32.totalorder %v67, %v71
    %vm100 = vcmp.ge.s32.totalorder %v68, %v71
    %vm101 = vcmp.ge.s32.totalorder %v69, %v71
    %vm102 = vcmp.ge.s32.totalorder %v62, %v72
    %vm103 = vcmp.ge.s32.totalorder %v63, %v72
    %vm104 = vcmp.ge.s32.totalorder %v64, %v72
    %vm105 = vcmp.ge.s32.totalorder %v65, %v72
    %vm106 = vcmp.ge.s32.totalorder %v66, %v72
    %vm107 = vcmp.ge.s32.totalorder %v67, %v72
    %vm108 = vcmp.ge.s32.totalorder %v68, %v72
    %vm109 = vcmp.ge.s32.totalorder %v69, %v72
    %vm110 = vcmp.ge.s32.totalorder %v62, %v73
    %vm111 = vcmp.ge.s32.totalorder %v63, %v73
    %vm112 = vcmp.ge.s32.totalorder %v64, %v73
    %vm113 = vcmp.ge.s32.totalorder %v65, %v73
    %vm114 = vcmp.ge.s32.totalorder %v66, %v73
    %vm115 = vcmp.ge.s32.totalorder %v67, %v73
    %vm116 = vcmp.ge.s32.totalorder %v68, %v73
    %vm117 = vcmp.ge.s32.totalorder %v69, %v73
    %vm118 = vcmp.ge.s32.totalorder %v62, %v74
    %vm119 = vcmp.ge.s32.totalorder %v63, %v74
    %vm120 = vcmp.ge.s32.totalorder %v64, %v74
    %vm121 = vcmp.ge.s32.totalorder %v65, %v74
    %vm122 = vcmp.ge.s32.totalorder %v66, %v74
    %vm123 = vcmp.ge.s32.totalorder %v67, %v74
    %vm124 = vcmp.ge.s32.totalorder %v68, %v74
    %vm125 = vcmp.ge.s32.totalorder %v69, %v74
    %vm126 = vcmp.ge.s32.totalorder %v62, %v75
    %vm127 = vcmp.ge.s32.totalorder %v63, %v75
    %vm128 = vcmp.ge.s32.totalorder %v64, %v75
    %vm129 = vcmp.ge.s32.totalorder %v65, %v75
    %vm130 = vcmp.ge.s32.totalorder %v66, %v75
    %vm131 = vcmp.ge.s32.totalorder %v67, %v75
    %vm132 = vcmp.ge.s32.totalorder %v68, %v75
    %vm133 = vcmp.ge.s32.totalorder %v69, %v75
    %vm134 = vcmp.ge.s32.totalorder %v62, %v76
    %vm135 = vcmp.ge.s32.totalorder %v63, %v76
    %vm136 = vcmp.ge.s32.totalorder %v64, %v76
    %vm137 = vcmp.ge.s32.totalorder %v65, %v76
    %vm138 = vcmp.ge.s32.totalorder %v66, %v76
    %vm139 = vcmp.ge.s32.totalorder %v67, %v76
    %vm140 = vcmp.ge.s32.totalorder %v68, %v76
    %vm141 = vcmp.ge.s32.totalorder %v69, %v76
    %vm142 = vcmp.ge.s32.totalorder %v62, %v77
    %vm143 = vcmp.ge.s32.totalorder %v63, %v77
    %vm144 = vcmp.ge.s32.totalorder %v64, %v77
    %vm145 = vcmp.ge.s32.totalorder %v65, %v77
    %vm146 = vcmp.ge.s32.totalorder %v66, %v77
    %vm147 = vcmp.ge.s32.totalorder %v67, %v77
    %vm148 = vcmp.ge.s32.totalorder %v68, %v77
    %vm149 = vcmp.ge.s32.totalorder %v69, %v77
    %vm150 = vcmp.ge.s32.totalorder %v62, %v78
    %vm151 = vcmp.ge.s32.totalorder %v63, %v78
    %vm152 = vcmp.ge.s32.totalorder %v64, %v78
    %vm153 = vcmp.ge.s32.totalorder %v65, %v78
    %vm154 = vcmp.ge.s32.totalorder %v66, %v78
    %vm155 = vcmp.ge.s32.totalorder %v67, %v78
    %vm156 = vcmp.ge.s32.totalorder %v68, %v78
    %vm157 = vcmp.ge.s32.totalorder %v69, %v78
    %vm158 = vcmp.ge.s32.totalorder %v62, %v79
    %vm159 = vcmp.ge.s32.totalorder %v63, %v79
    %vm160 = vcmp.ge.s32.totalorder %v64, %v79
    %vm161 = vcmp.ge.s32.totalorder %v65, %v79
    %vm162 = vcmp.ge.s32.totalorder %v66, %v79
    %vm163 = vcmp.ge.s32.totalorder %v67, %v79
    %vm164 = vcmp.ge.s32.totalorder %v68, %v79
    %vm165 = vcmp.ge.s32.totalorder %v69, %v79
    %vm166 = vcmp.ge.s32.totalorder %v62, %v80
    %vm167 = vcmp.ge.s32.totalorder %v63, %v80
    %vm168 = vcmp.ge.s32.totalorder %v64, %v80
    %vm169 = vcmp.ge.s32.totalorder %v65, %v80
    %vm170 = vcmp.ge.s32.totalorder %v66, %v80
    %vm171 = vcmp.ge.s32.totalorder %v67, %v80
    %vm172 = vcmp.ge.s32.totalorder %v68, %v80
    %vm173 = vcmp.ge.s32.totalorder %v69, %v80
    %vm174 = vcmp.ge.s32.totalorder %v62, %v81
    %vm175 = vcmp.ge.s32.totalorder %v63, %v81
    %vm176 = vcmp.ge.s32.totalorder %v64, %v81
    %vm177 = vcmp.ge.s32.totalorder %v65, %v81
    %vm178 = vcmp.ge.s32.totalorder %v66, %v81
    %vm179 = vcmp.ge.s32.totalorder %v67, %v81
    %vm180 = vcmp.ge.s32.totalorder %v68, %v81
    %vm181 = vcmp.ge.s32.totalorder %v69, %v81
    %vm182 = vcmp.ge.s32.totalorder %v62, %v82
    %vm183 = vcmp.ge.s32.totalorder %v63, %v82
    %vm184 = vcmp.ge.s32.totalorder %v64, %v82
    %vm185 = vcmp.ge.s32.totalorder %v65, %v82
    %vm186 = vcmp.ge.s32.totalorder %v66, %v82
    %vm187 = vcmp.ge.s32.totalorder %v67, %v82
    %vm188 = vcmp.ge.s32.totalorder %v68, %v82
    %vm189 = vcmp.ge.s32.totalorder %v69, %v82
    %vm190 = vcmp.ge.s32.totalorder %v62, %v83
    %vm191 = vcmp.ge.s32.totalorder %v63, %v83
    %vm192 = vcmp.ge.s32.totalorder %v64, %v83
    %vm193 = vcmp.ge.s32.totalorder %v65, %v83
    %vm194 = vcmp.ge.s32.totalorder %v66, %v83
    %vm195 = vcmp.ge.s32.totalorder %v67, %v83
    %vm196 = vcmp.ge.s32.totalorder %v68, %v83
    %vm197 = vcmp.ge.s32.totalorder %v69, %v83
    %vm198 = vcmp.ge.s32.totalorder %v62, %v84
    %vm199 = vcmp.ge.s32.totalorder %v63, %v84
    %vm200 = vcmp.ge.s32.totalorder %v64, %v84
    %vm201 = vcmp.ge.s32.totalorder %v65, %v84
    %vm202 = vcmp.ge.s32.totalorder %v66, %v84
    %vm203 = vcmp.ge.s32.totalorder %v67, %v84
    %vm204 = vcmp.ge.s32.totalorder %v68, %v84
    %vm205 = vcmp.ge.s32.totalorder %v69, %v84
    %vm206 = vcmp.ge.s32.totalorder %v62, %v85
    %vm207 = vcmp.ge.s32.totalorder %v63, %v85
    %vm208 = vcmp.ge.s32.totalorder %v64, %v85
    %vm209 = vcmp.ge.s32.totalorder %v65, %v85
    %vm210 = vcmp.ge.s32.totalorder %v66, %v85
    %vm211 = vcmp.ge.s32.totalorder %v67, %v85
    %vm212 = vcmp.ge.s32.totalorder %v68, %v85
    %vm213 = vcmp.ge.s32.totalorder %v69, %v85
    %v214 = vadd.s32 %v70, 8
    %v215 = vadd.s32 %v71, 8
    %v216 = vadd.s32 %v72, 8
    %v217 = vadd.s32 %v73, 8
    %v218 = vadd.s32 %v74, 8
    %v219 = vadd.s32 %v75, 8
    %v220 = vadd.s32 %v76, 8
    %v221 = vadd.s32 %v77, 8
    %v222 = vadd.s32 %v78, 8
    %v223 = vadd.s32 %v79, 8
    %v224 = vadd.s32 %v80, 8
    %v225 = vadd.s32 %v81, 8
    %v226 = vadd.s32 %v82, 8
    %v227 = vadd.s32 %v83, 8
    %v228 = vadd.s32 %v84, 8
    %v229 = vadd.s32 %v85, 8
    %vm230 = vcmp.lt.s32.totalorder %v62, %v214
    %vm231 = vcmp.lt.s32.totalorder %v63, %v214
    %vm232 = vcmp.lt.s32.totalorder %v64, %v214
    %vm233 = vcmp.lt.s32.totalorder %v65, %v214
    %vm234 = vcmp.lt.s32.totalorder %v66, %v214
    %vm235 = vcmp.lt.s32.totalorder %v67, %v214
    %vm236 = vcmp.lt.s32.totalorder %v68, %v214
    %vm237 = vcmp.lt.s32.totalorder %v69, %v214
    %vm238 = vcmp.lt.s32.totalorder %v62, %v215
    %vm239 = vcmp.lt.s32.totalorder %v63, %v215
    %vm240 = vcmp.lt.s32.totalorder %v64, %v215
    %vm241 = vcmp.lt.s32.totalorder %v65, %v215
    %vm242 = vcmp.lt.s32.totalorder %v66, %v215
    %vm243 = vcmp.lt.s32.totalorder %v67, %v215
    %vm244 = vcmp.lt.s32.totalorder %v68, %v215
    %vm245 = vcmp.lt.s32.totalorder %v69, %v215
    %vm246 = vcmp.lt.s32.totalorder %v62, %v216
    %vm247 = vcmp.lt.s32.totalorder %v63, %v216
    %vm248 = vcmp.lt.s32.totalorder %v64, %v216
    %vm249 = vcmp.lt.s32.totalorder %v65, %v216
    %vm250 = vcmp.lt.s32.totalorder %v66, %v216
    %vm251 = vcmp.lt.s32.totalorder %v67, %v216
    %vm252 = vcmp.lt.s32.totalorder %v68, %v216
    %vm253 = vcmp.lt.s32.totalorder %v69, %v216
    %vm254 = vcmp.lt.s32.totalorder %v62, %v217
    %vm255 = vcmp.lt.s32.totalorder %v63, %v217
    %vm256 = vcmp.lt.s32.totalorder %v64, %v217
    %vm257 = vcmp.lt.s32.totalorder %v65, %v217
    %vm258 = vcmp.lt.s32.totalorder %v66, %v217
    %vm259 = vcmp.lt.s32.totalorder %v67, %v217
    %vm260 = vcmp.lt.s32.totalorder %v68, %v217
    %vm261 = vcmp.lt.s32.totalorder %v69, %v217
    %vm262 = vcmp.lt.s32.totalorder %v62, %v218
    %vm263 = vcmp.lt.s32.totalorder %v63, %v218
    %vm264 = vcmp.lt.s32.totalorder %v64, %v218
    %vm265 = vcmp.lt.s32.totalorder %v65, %v218
    %vm266 = vcmp.lt.s32.totalorder %v66, %v218
    %vm267 = vcmp.lt.s32.totalorder %v67, %v218
    %vm268 = vcmp.lt.s32.totalorder %v68, %v218
    %vm269 = vcmp.lt.s32.totalorder %v69, %v218
    %vm270 = vcmp.lt.s32.totalorder %v62, %v219
    %vm271 = vcmp.lt.s32.totalorder %v63, %v219
    %vm272 = vcmp.lt.s32.totalorder %v64, %v219
    %vm273 = vcmp.lt.s32.totalorder %v65, %v219
    %vm274 = vcmp.lt.s32.totalorder %v66, %v219
    %vm275 = vcmp.lt.s32.totalorder %v67, %v219
    %vm276 = vcmp.lt.s32.totalorder %v68, %v219
    %vm277 = vcmp.lt.s32.totalorder %v69, %v219
    %vm278 = vcmp.lt.s32.totalorder %v62, %v220
    %vm279 = vcmp.lt.s32.totalorder %v63, %v220
    %vm280 = vcmp.lt.s32.totalorder %v64, %v220
    %vm281 = vcmp.lt.s32.totalorder %v65, %v220
    %vm282 = vcmp.lt.s32.totalorder %v66, %v220
    %vm283 = vcmp.lt.s32.totalorder %v67, %v220
    %vm284 = vcmp.lt.s32.totalorder %v68, %v220
    %vm285 = vcmp.lt.s32.totalorder %v69, %v220
    %vm286 = vcmp.lt.s32.totalorder %v62, %v221
    %vm287 = vcmp.lt.s32.totalorder %v63, %v221
    %vm288 = vcmp.lt.s32.totalorder %v64, %v221
    %vm289 = vcmp.lt.s32.totalorder %v65, %v221
    %vm290 = vcmp.lt.s32.totalorder %v66, %v221
    %vm291 = vcmp.lt.s32.totalorder %v67, %v221
    %vm292 = vcmp.lt.s32.totalorder %v68, %v221
    %vm293 = vcmp.lt.s32.totalorder %v69, %v221
    %vm294 = vcmp.lt.s32.totalorder %v62, %v222
    %vm295 = vcmp.lt.s32.totalorder %v63, %v222
    %vm296 = vcmp.lt.s32.totalorder %v64, %v222
    %vm297 = vcmp.lt.s32.totalorder %v65, %v222
    %vm298 = vcmp.lt.s32.totalorder %v66, %v222
    %vm299 = vcmp.lt.s32.totalorder %v67, %v222
    %vm300 = vcmp.lt.s32.totalorder %v68, %v222
    %vm301 = vcmp.lt.s32.totalorder %v69, %v222
    %vm302 = vcmp.lt.s32.totalorder %v62, %v223
    %vm303 = vcmp.lt.s32.totalorder %v63, %v223
    %vm304 = vcmp.lt.s32.totalorder %v64, %v223
    %vm305 = vcmp.lt.s32.totalorder %v65, %v223
    %vm306 = vcmp.lt.s32.totalorder %v66, %v223
    %vm307 = vcmp.lt.s32.totalorder %v67, %v223
    %vm308 = vcmp.lt.s32.totalorder %v68, %v223
    %vm309 = vcmp.lt.s32.totalorder %v69, %v223
    %vm310 = vcmp.lt.s32.totalorder %v62, %v224
    %vm311 = vcmp.lt.s32.totalorder %v63, %v224
    %vm312 = vcmp.lt.s32.totalorder %v64, %v224
    %vm313 = vcmp.lt.s32.totalorder %v65, %v224
    %vm314 = vcmp.lt.s32.totalorder %v66, %v224
    %vm315 = vcmp.lt.s32.totalorder %v67, %v224
    %vm316 = vcmp.lt.s32.totalorder %v68, %v224
    %vm317 = vcmp.lt.s32.totalorder %v69, %v224
    %vm318 = vcmp.lt.s32.totalorder %v62, %v225
    %vm319 = vcmp.lt.s32.totalorder %v63, %v225
    %vm320 = vcmp.lt.s32.totalorder %v64, %v225
    %vm321 = vcmp.lt.s32.totalorder %v65, %v225
    %vm322 = vcmp.lt.s32.totalorder %v66, %v225
    %vm323 = vcmp.lt.s32.totalorder %v67, %v225
    %vm324 = vcmp.lt.s32.totalorder %v68, %v225
    %vm325 = vcmp.lt.s32.totalorder %v69, %v225
    %vm326 = vcmp.lt.s32.totalorder %v62, %v226
    %vm327 = vcmp.lt.s32.totalorder %v63, %v226
    %vm328 = vcmp.lt.s32.totalorder %v64, %v226
    %vm329 = vcmp.lt.s32.totalorder %v65, %v226
    %vm330 = vcmp.lt.s32.totalorder %v66, %v226
    %vm331 = vcmp.lt.s32.totalorder %v67, %v226
    %vm332 = vcmp.lt.s32.totalorder %v68, %v226
    %vm333 = vcmp.lt.s32.totalorder %v69, %v226
    %vm334 = vcmp.lt.s32.totalorder %v62, %v227
    %vm335 = vcmp.lt.s32.totalorder %v63, %v227
    %vm336 = vcmp.lt.s32.totalorder %v64, %v227
    %vm337 = vcmp.lt.s32.totalorder %v65, %v227
    %vm338 = vcmp.lt.s32.totalorder %v66, %v227
    %vm339 = vcmp.lt.s32.totalorder %v67, %v227
    %vm340 = vcmp.lt.s32.totalorder %v68, %v227
    %vm341 = vcmp.lt.s32.totalorder %v69, %v227
    %vm342 = vcmp.lt.s32.totalorder %v62, %v228
    %vm343 = vcmp.lt.s32.totalorder %v63, %v228
    %vm344 = vcmp.lt.s32.totalorder %v64, %v228
    %vm345 = vcmp.lt.s32.totalorder %v65, %v228
    %vm346 = vcmp.lt.s32.totalorder %v66, %v228
    %vm347 = vcmp.lt.s32.totalorder %v67, %v228
    %vm348 = vcmp.lt.s32.totalorder %v68, %v228
    %vm349 = vcmp.lt.s32.totalorder %v69, %v228
    %vm350 = vcmp.lt.s32.totalorder %v62, %v229
    %vm351 = vcmp.lt.s32.totalorder %v63, %v229
    %vm352 = vcmp.lt.s32.totalorder %v64, %v229
    %vm353 = vcmp.lt.s32.totalorder %v65, %v229
    %vm354 = vcmp.lt.s32.totalorder %v66, %v229
    %vm355 = vcmp.lt.s32.totalorder %v67, %v229
    %vm356 = vcmp.lt.s32.totalorder %v68, %v229
    %vm357 = vcmp.lt.s32.totalorder %v69, %v229
    %vm358 = vmand %vm86, %vm230
    %vm359 = vmand %vm87, %vm231
    %vm360 = vmand %vm88, %vm232
    %vm361 = vmand %vm89, %vm233
    %vm362 = vmand %vm90, %vm234
    %vm363 = vmand %vm91, %vm235
    %vm364 = vmand %vm92, %vm236
    %vm365 = vmand %vm93, %vm237
    %vm366 = vmand %vm94, %vm238
    %vm367 = vmand %vm95, %vm239
    %vm368 = vmand %vm96, %vm240
    %vm369 = vmand %vm97, %vm241
    %vm370 = vmand %vm98, %vm242
    %vm371 = vmand %vm99, %vm243
    %vm372 = vmand %vm100, %vm244
    %vm373 = vmand %vm101, %vm245
    %vm374 = vmand %vm102, %vm246
    %vm375 = vmand %vm103, %vm247
    %vm376 = vmand %vm104, %vm248
    %vm377 = vmand %vm105, %vm249
    %vm378 = vmand %vm106, %vm250
    %vm379 = vmand %vm107, %vm251
    %vm380 = vmand %vm108, %vm252
    %vm381 = vmand %vm109, %vm253
    %vm382 = vmand %vm110, %vm254
    %vm383 = vmand %vm111, %vm255
    %vm384 = vmand %vm112, %vm256
    %vm385 = vmand %vm113, %vm257
    %vm386 = vmand %vm114, %vm258
    %vm387 = vmand %vm115, %vm259
    %vm388 = vmand %vm116, %vm260
    %vm389 = vmand %vm117, %vm261
    %vm390 = vmand %vm118, %vm262
    %vm391 = vmand %vm119, %vm263
    %vm392 = vmand %vm120, %vm264
    %vm393 = vmand %vm121, %vm265
    %vm394 = vmand %vm122, %vm266
    %vm395 = vmand %vm123, %vm267
    %vm396 = vmand %vm124, %vm268
    %vm397 = vmand %vm125, %vm269
    %vm398 = vmand %vm126, %vm270
    %vm399 = vmand %vm127, %vm271
    %vm400 = vmand %vm128, %vm272
    %vm401 = vmand %vm129, %vm273
    %vm402 = vmand %vm130, %vm274
    %vm403 = vmand %vm131, %vm275
    %vm404 = vmand %vm132, %vm276
    %vm405 = vmand %vm133, %vm277
    %vm406 = vmand %vm134, %vm278
    %vm407 = vmand %vm135, %vm279
    %vm408 = vmand %vm136, %vm280
    %vm409 = vmand %vm137, %vm281
    %vm410 = vmand %vm138, %vm282
    %vm411 = vmand %vm139, %vm283
    %vm412 = vmand %vm140, %vm284
    %vm413 = vmand %vm141, %vm285
    %vm414 = vmand %vm142, %vm286
    %vm415 = vmand %vm143, %vm287
    %vm416 = vmand %vm144, %vm288
    %vm417 = vmand %vm145, %vm289
    %vm418 = vmand %vm146, %vm290
    %vm419 = vmand %vm147, %vm291
    %vm420 = vmand %vm148, %vm292
    %vm421 = vmand %vm149, %vm293
    %vm422 = vmand %vm150, %vm294
    %vm423 = vmand %vm151, %vm295
    %vm424 = vmand %vm152, %vm296
    %vm425 = vmand %vm153, %vm297
    %vm426 = vmand %vm154, %vm298
    %vm427 = vmand %vm155, %vm299
    %vm428 = vmand %vm156, %vm300
    %vm429 = vmand %vm157, %vm301
    %vm430 = vmand %vm158, %vm302
    %vm431 = vmand %vm159, %vm303
    %vm432 = vmand %vm160, %vm304
    %vm433 = vmand %vm161, %vm305
    %vm434 = vmand %vm162, %vm306
    %vm435 = vmand %vm163, %vm307
    %vm436 = vmand %vm164, %vm308
    %vm437 = vmand %vm165, %vm309
    %vm438 = vmand %vm166, %vm310
    %vm439 = vmand %vm167, %vm311
    %vm440 = vmand %vm168, %vm312
    %vm441 = vmand %vm169, %vm313
    %vm442 = vmand %vm170, %vm314
    %vm443 = vmand %vm171, %vm315
    %vm444 = vmand %vm172, %vm316
    %vm445 = vmand %vm173, %vm317
    %vm446 = vmand %vm174, %vm318
    %vm447 = vmand %vm175, %vm319
    %vm448 = vmand %vm176, %vm320
    %vm449 = vmand %vm177, %vm321
    %vm450 = vmand %vm178, %vm322
    %vm451 = vmand %vm179, %vm323
    %vm452 = vmand %vm180, %vm324
    %vm453 = vmand %vm181, %vm325
    %vm454 = vmand %vm182, %vm326
    %vm455 = vmand %vm183, %vm327
    %vm456 = vmand %vm184, %vm328
    %vm457 = vmand %vm185, %vm329
    %vm458 = vmand %vm186, %vm330
    %vm459 = vmand %vm187, %vm331
    %vm460 = vmand %vm188, %vm332
    %vm461 = vmand %vm189, %vm333
    %vm462 = vmand %vm190, %vm334
    %vm463 = vmand %vm191, %vm335
    %vm464 = vmand %vm192, %vm336
    %vm465 = vmand %vm193, %vm337
    %vm466 = vmand %vm194, %vm338
    %vm467 = vmand %vm195, %vm339
    %vm468 = vmand %vm196, %vm340
    %vm469 = vmand %vm197, %vm341
    %vm470 = vmand %vm198, %vm342
    %vm471 = vmand %vm199, %vm343
    %vm472 = vmand %vm200, %vm344
    %vm473 = vmand %vm201, %vm345
    %vm474 = vmand %vm202, %vm346
    %vm475 = vmand %vm203, %vm347
    %vm476 = vmand %vm204, %vm348
    %vm477 = vmand %vm205, %vm349
    %vm478 = vmand %vm206, %vm350
    %vm479 = vmand %vm207, %vm351
    %vm480 = vmand %vm208, %vm352
    %vm481 = vmand %vm209, %vm353
    %vm482 = vmand %vm210, %vm354
    %vm483 = vmand %vm211, %vm355
    %vm484 = vmand %vm212, %vm356
    %vm485 = vmand %vm213, %vm357
    %v486 = vsel %vm358, 1, 0
    %v487 = vsel %vm359, 1, 0
    %v488 = vsel %vm360, 1, 0
    %v489 = vsel %vm361, 1, 0
    %v490 = vsel %vm362, 1, 0
    %v491 = vsel %vm363, 1, 0
    %v492 = vsel %vm364, 1, 0
    %v493 = vsel %vm365, 1, 0
    %v494 = vsel %vm366, 1, 0
    %v495 = vsel %vm367, 1, 0
    %v496 = vsel %vm368, 1, 0
    %v497 = vsel %vm369, 1, 0
    %v498 = vsel %vm370, 1, 0
    %v499 = vsel %vm371, 1, 0
    %v500 = vsel %vm372, 1, 0
    %v501 = vsel %vm373, 1, 0
    %v502 = vsel %vm374, 1, 0
    %v503 = vsel %vm375, 1, 0
    %v504 = vsel %vm376, 1, 0
    %v505 = vsel %vm377, 1, 0
    %v506 = vsel %vm378, 1, 0
    %v507 = vsel %vm379, 1, 0
    %v508 = vsel %vm380, 1, 0
    %v509 = vsel %vm381, 1, 0
    %v510 = vsel %vm382, 1, 0
    %v511 = vsel %vm383, 1, 0
    %v512 = vsel %vm384, 1, 0
    %v513 = vsel %vm385, 1, 0
    %v514 = vsel %vm386, 1, 0
    %v515 = vsel %vm387, 1, 0
    %v516 = vsel %vm388, 1, 0
    %v517 = vsel %vm389, 1, 0
    %v518 = vsel %vm390, 1, 0
    %v519 = vsel %vm391, 1, 0
    %v520 = vsel %vm392, 1, 0
    %v521 = vsel %vm393, 1, 0
    %v522 = vsel %vm394, 1, 0
    %v523 = vsel %vm395, 1, 0
    %v524 = vsel %vm396, 1, 0
    %v525 = vsel %vm397, 1, 0
    %v526 = vsel %vm398, 1, 0
    %v527 = vsel %vm399, 1, 0
    %v528 = vsel %vm400, 1, 0
    %v529 = vsel %vm401, 1, 0
    %v530 = vsel %vm402, 1, 0
    %v531 = vsel %vm403, 1, 0
    %v532 = vsel %vm404, 1, 0
    %v533 = vsel %vm405, 1, 0
    %v534 = vsel %vm406, 1, 0
    %v535 = vsel %vm407, 1, 0
    %v536 = vsel %vm408, 1, 0
    %v537 = vsel %vm409, 1, 0
    %v538 = vsel %vm410, 1, 0
    %v539 = vsel %vm411, 1, 0
    %v540 = vsel %vm412, 1, 0
    %v541 = vsel %vm413, 1, 0
    %v542 = vsel %vm414, 1, 0
    %v543 = vsel %vm415, 1, 0
    %v544 = vsel %vm416, 1, 0
    %v545 = vsel %vm417, 1, 0
    %v546 = vsel %vm418, 1, 0
    %v547 = vsel %vm419, 1, 0
    %v548 = vsel %vm420, 1, 0
    %v549 = vsel %vm421, 1, 0
    %v550 = vsel %vm422, 1, 0
    %v551 = vsel %vm423, 1, 0
    %v552 = vsel %vm424, 1, 0
    %v553 = vsel %vm425, 1, 0
    %v554 = vsel %vm426, 1, 0
    %v555 = vsel %vm427, 1, 0
    %v556 = vsel %vm428, 1, 0
    %v557 = vsel %vm429, 1, 0
    %v558 = vsel %vm430, 1, 0
    %v559 = vsel %vm431, 1, 0
    %v560 = vsel %vm432, 1, 0
    %v561 = vsel %vm433, 1, 0
    %v562 = vsel %vm434, 1, 0
    %v563 = vsel %vm435, 1, 0
    %v564 = vsel %vm436, 1, 0
    %v565 = vsel %vm437, 1, 0
    %v566 = vsel %vm438, 1, 0
    %v567 = vsel %vm439, 1, 0
    %v568 = vsel %vm440, 1, 0
    %v569 = vsel %vm441, 1, 0
    %v570 = vsel %vm442, 1, 0
    %v571 = vsel %vm443, 1, 0
    %v572 = vsel %vm444, 1, 0
    %v573 = vsel %vm445, 1, 0
    %v574 = vsel %vm446, 1, 0
    %v575 = vsel %vm447, 1, 0
    %v576 = vsel %vm448, 1, 0
    %v577 = vsel %vm449, 1, 0
    %v578 = vsel %vm450, 1, 0
    %v579 = vsel %vm451, 1, 0
    %v580 = vsel %vm452, 1, 0
    %v581 = vsel %vm453, 1, 0
    %v582 = vsel %vm454, 1, 0
    %v583 = vsel %vm455, 1, 0
    %v584 = vsel %vm456, 1, 0
    %v585 = vsel %vm457, 1, 0
    %v586 = vsel %vm458, 1, 0
    %v587 = vsel %vm459, 1, 0
    %v588 = vsel %vm460, 1, 0
    %v589 = vsel %vm461, 1, 0
    %v590 = vsel %vm462, 1, 0
    %v591 = vsel %vm463, 1, 0
    %v592 = vsel %vm464, 1, 0
    %v593 = vsel %vm465, 1, 0
    %v594 = vsel %vm466, 1, 0
    %v595 = vsel %vm467, 1, 0
    %v596 = vsel %vm468, 1, 0
    %v597 = vsel %vm469, 1, 0
    %v598 = vsel %vm470, 1, 0
    %v599 = vsel %vm471, 1, 0
    %v600 = vsel %vm472, 1, 0
    %v601 = vsel %vm473, 1, 0
    %v602 = vsel %vm474, 1, 0
    %v603 = vsel %vm475, 1, 0
    %v604 = vsel %vm476, 1, 0
    %v605 = vsel %vm477, 1, 0
    %v606 = vsel %vm478, 1, 0
    %v607 = vsel %vm479, 1, 0
    %v608 = vsel %vm480, 1, 0
    %v609 = vsel %vm481, 1, 0
    %v610 = vsel %vm482, 1, 0
    %v611 = vsel %vm483, 1, 0
    %v612 = vsel %vm484, 1, 0
    %v613 = vsel %vm485, 1, 0
    %v614 = vcvt.s32.f32 %v486
    %v615 = vcvt.s32.f32 %v487
    %v616 = vcvt.s32.f32 %v488
    %v617 = vcvt.s32.f32 %v489
    %v618 = vcvt.s32.f32 %v490
    %v619 = vcvt.s32.f32 %v491
    %v620 = vcvt.s32.f32 %v492
    %v621 = vcvt.s32.f32 %v493
    %v622 = vcvt.s32.f32 %v494
    %v623 = vcvt.s32.f32 %v495
    %v624 = vcvt.s32.f32 %v496
    %v625 = vcvt.s32.f32 %v497
    %v626 = vcvt.s32.f32 %v498
    %v627 = vcvt.s32.f32 %v499
    %v628 = vcvt.s32.f32 %v500
    %v629 = vcvt.s32.f32 %v501
    %v630 = vcvt.s32.f32 %v502
    %v631 = vcvt.s32.f32 %v503
    %v632 = vcvt.s32.f32 %v504
    %v633 = vcvt.s32.f32 %v505
    %v634 = vcvt.s32.f32 %v506
    %v635 = vcvt.s32.f32 %v507
    %v636 = vcvt.s32.f32 %v508
    %v637 = vcvt.s32.f32 %v509
    %v638 = vcvt.s32.f32 %v510
    %v639 = vcvt.s32.f32 %v511
    %v640 = vcvt.s32.f32 %v512
    %v641 = vcvt.s32.f32 %v513
    %v642 = vcvt.s32.f32 %v514
    %v643 = vcvt.s32.f32 %v515
    %v644 = vcvt.s32.f32 %v516
    %v645 = vcvt.s32.f32 %v517
    %v646 = vcvt.s32.f32 %v518
    %v647 = vcvt.s32.f32 %v519
    %v648 = vcvt.s32.f32 %v520
    %v649 = vcvt.s32.f32 %v521
    %v650 = vcvt.s32.f32 %v522
    %v651 = vcvt.s32.f32 %v523
    %v652 = vcvt.s32.f32 %v524
    %v653 = vcvt.s32.f32 %v525
    %v654 = vcvt.s32.f32 %v526
    %v655 = vcvt.s32.f32 %v527
    %v656 = vcvt.s32.f32 %v528
    %v657 = vcvt.s32.f32 %v529
    %v658 = vcvt.s32.f32 %v530
    %v659 = vcvt.s32.f32 %v531
    %v660 = vcvt.s32.f32 %v532
    %v661 = vcvt.s32.f32 %v533
    %v662 = vcvt.s32.f32 %v534
    %v663 = vcvt.s32.f32 %v535
    %v664 = vcvt.s32.f32 %v536
    %v665 = vcvt.s32.f32 %v537
    %v666 = vcvt.s32.f32 %v538
    %v667 = vcvt.s32.f32 %v539
    %v668 = vcvt.s32.f32 %v540
    %v669 = vcvt.s32.f32 %v541
    %v670 = vcvt.s32.f32 %v542
    %v671 = vcvt.s32.f32 %v543
    %v672 = vcvt.s32.f32 %v544
    %v673 = vcvt.s32.f32 %v545
    %v674 = vcvt.s32.f32 %v546
    %v675 = vcvt.s32.f32 %v547
    %v676 = vcvt.s32.f32 %v548
    %v677 = vcvt.s32.f32 %v549
    %v678 = vcvt.s32.f32 %v550
    %v679 = vcvt.s32.f32 %v551
    %v680 = vcvt.s32.f32 %v552
    %v681 = vcvt.s32.f32 %v553
    %v682 = vcvt.s32.f32 %v554
    %v683 = vcvt.s32.f32 %v555
    %v684 = vcvt.s32.f32 %v556
    %v685 = vcvt.s32.f32 %v557
    %v686 = vcvt.s32.f32 %v558
    %v687 = vcvt.s32.f32 %v559
    %v688 = vcvt.s32.f32 %v560
    %v689 = vcvt.s32.f32 %v561
    %v690 = vcvt.s32.f32 %v562
    %v691 = vcvt.s32.f32 %v563
    %v692 = vcvt.s32.f32 %v564
    %v693 = vcvt.s32.f32 %v565
    %v694 = vcvt.s32.f32 %v566
    %v695 = vcvt.s32.f32 %v567
    %v696 = vcvt.s32.f32 %v568
    %v697 = vcvt.s32.f32 %v569
    %v698 = vcvt.s32.f32 %v570
    %v699 = vcvt.s32.f32 %v571
    %v700 = vcvt.s32.f32 %v572
    %v701 = vcvt.s32.f32 %v573
    %v702 = vcvt.s32.f32 %v574
    %v703 = vcvt.s32.f32 %v575
    %v704 = vcvt.s32.f32 %v576
    %v705 = vcvt.s32.f32 %v577
    %v706 = vcvt.s32.f32 %v578
    %v707 = vcvt.s32.f32 %v579
    %v708 = vcvt.s32.f32 %v580
    %v709 = vcvt.s32.f32 %v581
    %v710 = vcvt.s32.f32 %v582
    %v711 = vcvt.s32.f32 %v583
    %v712 = vcvt.s32.f32 %v584
    %v713 = vcvt.s32.f32 %v585
    %v714 = vcvt.s32.f32 %v586
    %v715 = vcvt.s32.f32 %v587
    %v716 = vcvt.s32.f32 %v588
    %v717 = vcvt.s32.f32 %v589
    %v718 = vcvt.s32.f32 %v590
    %v719 = vcvt.s32.f32 %v591
    %v720 = vcvt.s32.f32 %v592
    %v721 = vcvt.s32.f32 %v593
    %v722 = vcvt.s32.f32 %v594
    %v723 = vcvt.s32.f32 %v595
    %v724 = vcvt.s32.f32 %v596
    %v725 = vcvt.s32.f32 %v597
    %v726 = vcvt.s32.f32 %v598
    %v727 = vcvt.s32.f32 %v599
    %v728 = vcvt.s32.f32 %v600
    %v729 = vcvt.s32.f32 %v601
    %v730 = vcvt.s32.f32 %v602
    %v731 = vcvt.s32.f32 %v603
    %v732 = vcvt.s32.f32 %v604
    %v733 = vcvt.s32.f32 %v605
    %v734 = vcvt.s32.f32 %v606
    %v735 = vcvt.s32.f32 %v607
    %v736 = vcvt.s32.f32 %v608
    %v737 = vcvt.s32.f32 %v609
    %v738 = vcvt.s32.f32 %v610
    %v739 = vcvt.s32.f32 %v611
    %v740 = vcvt.s32.f32 %v612
    %v741 = vcvt.s32.f32 %v613
    %742 = vmatprep.subr.mxu0 %v615
    %743 = vmatpush1.msra.mxu0 %v614
    %744 = vmatprep.subr.mxu0 %v623
    %745 = vmatpush1.msra.mxu0 %v622
    %746 = vmatprep.subr.mxu0 %v631
    %747 = vmatpush1.msra.mxu0 %v630
    %748 = vmatprep.subr.mxu0 %v639
    %749 = vmatpush1.msra.mxu0 %v638
    %750 = vmatprep.subr.mxu0 %v647
    %751 = vmatpush1.msra.mxu0 %v646
    %752 = vmatprep.subr.mxu0 %v655
    %753 = vmatpush1.msra.mxu0 %v654
    %754 = vmatprep.subr.mxu0 %v663
    %755 = vmatpush1.msra.mxu0 %v662
    %756 = vmatprep.subr.mxu0 %v671
    %757 = vmatpush1.msra.mxu0 %v670
    %758 = vmatprep.subr.mxu0 %v679
    %759 = vmatpush1.msra.mxu0 %v678
    %760 = vmatprep.subr.mxu0 %v687
    %761 = vmatpush1.msra.mxu0 %v686
    %762 = vmatprep.subr.mxu0 %v695
    %763 = vmatpush1.msra.mxu0 %v694
    %764 = vmatprep.subr.mxu0 %v703
    %765 = vmatpush1.msra.mxu0 %v702
    %766 = vmatprep.subr.mxu0 %v711
    %767 = vmatpush1.msra.mxu0 %v710
    %768 = vmatprep.subr.mxu0 %v719
    %769 = vmatpush1.msra.mxu0 %v718
    %770 = vmatprep.subr.mxu0 %v727
    %771 = vmatpush1.msra.mxu0 %v726
    %772 = vmatprep.subr.mxu0 %v735
    %773 = vmatpush1.msra.mxu0 %v734
    %774 = vmatprep.subr.mxu0 0.0
    %775 = vmatpush1.msra.mxu0 0.0
    %776 = vmatprep.subr.mxu0 0.0
    %777 = vmatpush1.msra.mxu0 0.0
    %778 = vmatprep.subr.mxu0 0.0
    %779 = vmatpush1.msra.mxu0 0.0
    %780 = vmatprep.subr.mxu0 0.0
    %781 = vmatpush1.msra.mxu0 0.0
    %782 = vmatprep.subr.mxu0 0.0
    %783 = vmatpush1.msra.mxu0 0.0
    %784 = vmatprep.subr.mxu0 0.0
    %785 = vmatpush1.msra.mxu0 0.0
    %786 = vmatprep.subr.mxu0 0.0
    %787 = vmatpush1.msra.mxu0 0.0
    %788 = vmatprep.subr.mxu0 0.0
    %789 = vmatpush1.msra.mxu0 0.0
    %790 = vmatprep.subr.mxu0 0.0
    %791 = vmatpush1.msra.mxu0 0.0
    %792 = vmatprep.subr.mxu0 0.0
    %793 = vmatpush1.msra.mxu0 0.0
    %794 = vmatprep.subr.mxu0 0.0
    %795 = vmatpush1.msra.mxu0 0.0
    %796 = vmatprep.subr.mxu0 0.0
    %797 = vmatpush1.msra.mxu0 0.0
    %798 = vmatprep.subr.mxu0 0.0
    %799 = vmatpush1.msra.mxu0 0.0
    %800 = vmatprep.subr.mxu0 0.0
    %801 = vmatpush1.msra.mxu0 0.0
    %802 = vmatprep.subr.mxu0 0.0
    %803 = vmatpush1.msra.mxu0 0.0
    %804 = vmatprep.subr.mxu0 0.0
    %805 = vmatpush1.msra.mxu0 0.0
    %806 = vmatprep.mubr.f32.mxu0 0.0
    %807 = vmatmul.mubr.f32.gmra.mrb[0].mxu0 %v43
    %v808 = vpop.f32.mrb[0].mxu0
    %v809 = vadd.f32 0.0, %v808
    %v810 = vpop.f32.mrb[0].mxu0
    %v811 = vadd.f32 0.0, %v810
    %812 = vdwg.mxu0
    %813 = vmatprep.subr.mxu0 %v617
    %814 = vmatpush1.msra.mxu0 %v616
    %815 = vmatprep.subr.mxu0 %v625
    %816 = vmatpush1.msra.mxu0 %v624
    %817 = vmatprep.subr.mxu0 %v633
    %818 = vmatpush1.msra.mxu0 %v632
    %819 = vmatprep.subr.mxu0 %v641
    %820 = vmatpush1.msra.mxu0 %v640
    %821 = vmatprep.subr.mxu0 %v649
    %822 = vmatpush1.msra.mxu0 %v648
    %823 = vmatprep.subr.mxu0 %v657
    %824 = vmatpush1.msra.mxu0 %v656
    %825 = vmatprep.subr.mxu0 %v665
    %826 = vmatpush1.msra.mxu0 %v664
    %827 = vmatprep.subr.mxu0 %v673
    %828 = vmatpush1.msra.mxu0 %v672
    %829 = vmatprep.subr.mxu0 %v681
    %830 = vmatpush1.msra.mxu0 %v680
    %831 = vmatprep.subr.mxu0 %v689
    %832 = vmatpush1.msra.mxu0 %v688
    %833 = vmatprep.subr.mxu0 %v697
    %834 = vmatpush1.msra.mxu0 %v696
    %835 = vmatprep.subr.mxu0 %v705
    %836 = vmatpush1.msra.mxu0 %v704
    %837 = vmatprep.subr.mxu0 %v713
    %838 = vmatpush1.msra.mxu0 %v712
    %839 = vmatprep.subr.mxu0 %v721
    %840 = vmatpush1.msra.mxu0 %v720
    %841 = vmatprep.subr.mxu0 %v729
    %842 = vmatpush1.msra.mxu0 %v728
    %843 = vmatprep.subr.mxu0 %v737
    %844 = vmatpush1.msra.mxu0 %v736
    %845 = vmatprep.subr.mxu0 0.0
    %846 = vmatpush1.msra.mxu0 0.0
    %847 = vmatprep.subr.mxu0 0.0
    %848 = vmatpush1.msra.mxu0 0.0
    %849 = vmatprep.subr.mxu0 0.0
    %850 = vmatpush1.msra.mxu0 0.0
    %851 = vmatprep.subr.mxu0 0.0
    %852 = vmatpush1.msra.mxu0 0.0
    %853 = vmatprep.subr.mxu0 0.0
    %854 = vmatpush1.msra.mxu0 0.0
    %855 = vmatprep.subr.mxu0 0.0
    %856 = vmatpush1.msra.mxu0 0.0
    %857 = vmatprep.subr.mxu0 0.0
    %858 = vmatpush1.msra.mxu0 0.0
    %859 = vmatprep.subr.mxu0 0.0
    %860 = vmatpush1.msra.mxu0 0.0
    %861 = vmatprep.subr.mxu0 0.0
    %862 = vmatpush1.msra.mxu0 0.0
    %863 = vmatprep.subr.mxu0 0.0
    %864 = vmatpush1.msra.mxu0 0.0
    %865 = vmatprep.subr.mxu0 0.0
    %866 = vmatpush1.msra.mxu0 0.0
    %867 = vmatprep.subr.mxu0 0.0
    %868 = vmatpush1.msra.mxu0 0.0
    %869 = vmatprep.subr.mxu0 0.0
    %870 = vmatpush1.msra.mxu0 0.0
    %871 = vmatprep.subr.mxu0 0.0
    %872 = vmatpush1.msra.mxu0 0.0
    %873 = vmatprep.subr.mxu0 0.0
    %874 = vmatpush1.msra.mxu0 0.0
    %875 = vmatprep.subr.mxu0 0.0
    %876 = vmatpush1.msra.mxu0 0.0
    %877 = vmatprep.mubr.f32.mxu0 0.0
    %878 = vmatmul.mubr.f32.gmra.mrb[0].mxu0 %v43
    %v879 = vpop.f32.mrb[0].mxu0
    %v880 = vadd.f32 0.0, %v879
    %v881 = vpop.f32.mrb[0].mxu0
    %v882 = vadd.f32 0.0, %v881
    %883 = vdwg.mxu0
    %884 = vmatprep.subr.mxu0 %v619
    %885 = vmatpush1.msra.mxu0 %v618
    %886 = vmatprep.subr.mxu0 %v627
    %887 = vmatpush1.msra.mxu0 %v626
    %888 = vmatprep.subr.mxu0 %v635
    %889 = vmatpush1.msra.mxu0 %v634
    %890 = vmatprep.subr.mxu0 %v643
    %891 = vmatpush1.msra.mxu0 %v642
    %892 = vmatprep.subr.mxu0 %v651
    %893 = vmatpush1.msra.mxu0 %v650
    %894 = vmatprep.subr.mxu0 %v659
    %895 = vmatpush1.msra.mxu0 %v658
    %896 = vmatprep.subr.mxu0 %v667
    %897 = vmatpush1.msra.mxu0 %v666
    %898 = vmatprep.subr.mxu0 %v675
    %899 = vmatpush1.msra.mxu0 %v674
    %900 = vmatprep.subr.mxu0 %v683
    %901 = vmatpush1.msra.mxu0 %v682
    %902 = vmatprep.subr.mxu0 %v691
    %903 = vmatpush1.msra.mxu0 %v690
    %904 = vmatprep.subr.mxu0 %v699
    %905 = vmatpush1.msra.mxu0 %v698
    %906 = vmatprep.subr.mxu0 %v707
    %907 = vmatpush1.msra.mxu0 %v706
    %908 = vmatprep.subr.mxu0 %v715
    %909 = vmatpush1.msra.mxu0 %v714
    %910 = vmatprep.subr.mxu0 %v723
    %911 = vmatpush1.msra.mxu0 %v722
    %912 = vmatprep.subr.mxu0 %v731
    %913 = vmatpush1.msra.mxu0 %v730
    %914 = vmatprep.subr.mxu0 %v739
    %915 = vmatpush1.msra.mxu0 %v738
    %916 = vmatprep.subr.mxu0 0.0
    %917 = vmatpush1.msra.mxu0 0.0
    %918 = vmatprep.subr.mxu0 0.0
    %919 = vmatpush1.msra.mxu0 0.0
    %920 = vmatprep.subr.mxu0 0.0
    %921 = vmatpush1.msra.mxu0 0.0
    %922 = vmatprep.subr.mxu0 0.0
    %923 = vmatpush1.msra.mxu0 0.0
    %924 = vmatprep.subr.mxu0 0.0
    %925 = vmatpush1.msra.mxu0 0.0
    %926 = vmatprep.subr.mxu0 0.0
    %927 = vmatpush1.msra.mxu0 0.0
    %928 = vmatprep.subr.mxu0 0.0
    %929 = vmatpush1.msra.mxu0 0.0
    %930 = vmatprep.subr.mxu0 0.0
    %931 = vmatpush1.msra.mxu0 0.0
    %932 = vmatprep.subr.mxu0 0.0
    %933 = vmatpush1.msra.mxu0 0.0
    %934 = vmatprep.subr.mxu0 0.0
    %935 = vmatpush1.msra.mxu0 0.0
    %936 = vmatprep.subr.mxu0 0.0
    %937 = vmatpush1.msra.mxu0 0.0
    %938 = vmatprep.subr.mxu0 0.0
    %939 = vmatpush1.msra.mxu0 0.0
    %940 = vmatprep.subr.mxu0 0.0
    %941 = vmatpush1.msra.mxu0 0.0
    %942 = vmatprep.subr.mxu0 0.0
    %943 = vmatpush1.msra.mxu0 0.0
    %944 = vmatprep.subr.mxu0 0.0
    %945 = vmatpush1.msra.mxu0 0.0
    %946 = vmatprep.subr.mxu0 0.0
    %947 = vmatpush1.msra.mxu0 0.0
    %948 = vmatprep.mubr.f32.mxu0 0.0
    %949 = vmatmul.mubr.f32.gmra.mrb[0].mxu0 %v43
    %v950 = vpop.f32.mrb[0].mxu0
    %v951 = vadd.f32 0.0, %v950
    %v952 = vpop.f32.mrb[0].mxu0
    %v953 = vadd.f32 0.0, %v952
    %954 = vdwg.mxu0
    %955 = vmatprep.subr.mxu0 %v621
    %956 = vmatpush1.msra.mxu0 %v620
    %957 = vmatprep.subr.mxu0 %v629
    %958 = vmatpush1.msra.mxu0 %v628
    %959 = vmatprep.subr.mxu0 %v637
    %960 = vmatpush1.msra.mxu0 %v636
    %961 = vmatprep.subr.mxu0 %v645
    %962 = vmatpush1.msra.mxu0 %v644
    %963 = vmatprep.subr.mxu0 %v653
    %964 = vmatpush1.msra.mxu0 %v652
    %965 = vmatprep.subr.mxu0 %v661
    %966 = vmatpush1.msra.mxu0 %v660
    %967 = vmatprep.subr.mxu0 %v669
    %968 = vmatpush1.msra.mxu0 %v668
    %969 = vmatprep.subr.mxu0 %v677
    %970 = vmatpush1.msra.mxu0 %v676
    %971 = vmatprep.subr.mxu0 %v685
    %972 = vmatpush1.msra.mxu0 %v684
    %973 = vmatprep.subr.mxu0 %v693
    %974 = vmatpush1.msra.mxu0 %v692
    %975 = vmatprep.subr.mxu0 %v701
    %976 = vmatpush1.msra.mxu0 %v700
    %977 = vmatprep.subr.mxu0 %v709
    %978 = vmatpush1.msra.mxu0 %v708
    %979 = vmatprep.subr.mxu0 %v717
    %980 = vmatpush1.msra.mxu0 %v716
    %981 = vmatprep.subr.mxu0 %v725
    %982 = vmatpush1.msra.mxu0 %v724
    %983 = vmatprep.subr.mxu0 %v733
    %984 = vmatpush1.msra.mxu0 %v732
    %985 = vmatprep.subr.mxu0 %v741
    %986 = vmatpush1.msra.mxu0 %v740
    %987 = vmatprep.subr.mxu0 0.0
    %988 = vmatpush1.msra.mxu0 0.0
    %989 = vmatprep.subr.mxu0 0.0
    %990 = vmatpush1.msra.mxu0 0.0
    %991 = vmatprep.subr.mxu0 0.0
    %992 = vmatpush1.msra.mxu0 0.0
    %993 = vmatprep.subr.mxu0 0.0
    %994 = vmatpush1.msra.mxu0 0.0
    %995 = vmatprep.subr.mxu0 0.0
    %996 = vmatpush1.msra.mxu0 0.0
    %997 = vmatprep.subr.mxu0 0.0
    %998 = vmatpush1.msra.mxu0 0.0
    %999 = vmatprep.subr.mxu0 0.0
    %1000 = vmatpush1.msra.mxu0 0.0
    %1001 = vmatprep.subr.mxu0 0.0
    %1002 = vmatpush1.msra.mxu0 0.0
    %1003 = vmatprep.subr.mxu0 0.0
    %1004 = vmatpush1.msra.mxu0 0.0
    %1005 = vmatprep.subr.mxu0 0.0
    %1006 = vmatpush1.msra.mxu0 0.0
    %1007 = vmatprep.subr.mxu0 0.0
    %1008 = vmatpush1.msra.mxu0 0.0
    %1009 = vmatprep.subr.mxu0 0.0
    %1010 = vmatpush1.msra.mxu0 0.0
    %1011 = vmatprep.subr.mxu0 0.0
    %1012 = vmatpush1.msra.mxu0 0.0
    %1013 = vmatprep.subr.mxu0 0.0
    %1014 = vmatpush1.msra.mxu0 0.0
    %1015 = vmatprep.subr.mxu0 0.0
    %1016 = vmatpush1.msra.mxu0 0.0
    %1017 = vmatprep.subr.mxu0 0.0
    %1018 = vmatpush1.msra.mxu0 0.0
    %1019 = vmatprep.mubr.f32.mxu0 0.0
    %1020 = vmatmul.mubr.f32.gmra.mrb[0].mxu0 %v43
    %v1021 = vpop.f32.mrb[0].mxu0
    %v1022 = vadd.f32 0.0, %v1021
    %v1023 = vpop.f32.mrb[0].mxu0
    %v1024 = vadd.f32 0.0, %v1023
    %1025 = vdwg.mxu0
    %v1026 = vand.u32 2147483647, %v39
    %v1027 = vand.u32 2147483647, %v40
    %v1028 = vsub.f32 0.0, %v1026
    %v1029 = vsub.f32 0.0, %v1027
    %v1030 = vmul.f32 %v1028, 1.442695
    %v1031 = vpow.pop %v1030
    %v1032 = vmul.f32 %v1029, 1.442695
    %v1033 = vpow.pop %v1032
    %v1034 = vadd.f32 %v1031, 1.0
    %v1035 = vadd.f32 %v1033, 1.0
    %v1036 = vrcp.pop %v1034
    %v1037 = vmul.f32 1.0, %v1036
    %v1038 = vrcp.pop %v1035
    %v1039 = vmul.f32 1.0, %v1038
    %vm1040 = vcmp.ge.f32.partialorder %v39, 0.0
    %vm1041 = vcmp.ge.f32.partialorder %v40, 0.0
    %v1042 = vmul.f32 %v1031, %v1037
    %v1043 = vmul.f32 %v1033, %v1039
    %v1044 = vsel %vm1040, %v1037, %v1042
    %v1045 = vsel %vm1041, %v1039, %v1043
    %v1046 = vmul.f32 %v41, 0.25
    %v1047 = vmul.f32 %v42, 0.25
    %v1048 = vsub.f32 1.0, %v41
    %v1049 = vsub.f32 1.0, %v42
    %v1050 = vmul.f32 %v1048, 0.75
    %v1051 = vmul.f32 %v1049, 0.75
    %v1052 = vadd.f32 %v1046, %v1050
    %v1053 = vadd.f32 %v1047, %v1051
    %v1054 = vsub.f32 1.0, %v1044
    %v1055 = vsub.f32 1.0, %v1045
    %v1056 = vmul.f32 %v41, %v1054
    %v1057 = vmul.f32 %v42, %v1055
    %v1058 = vmul.f32 %v1048, %v1044
    %v1059 = vmul.f32 %v1049, %v1045
    %v1060 = vadd.f32 %v1056, %v1058
    %v1061 = vadd.f32 %v1057, %v1059
    %v1062 = vmul.f32 %v1060, %v1060
    %v1063 = vmul.f32 %v1061, %v1061
    %v1064 = vmul.f32 %v1052, %v1062
    %v1065 = vmul.f32 %v1053, %v1063
    %v1066 = vmax.f32 %v39, 0.0
    %v1067 = vmax.f32 %v40, 0.0
    %v1068 = vmul.f32 %v39, %v41
    %v1069 = vmul.f32 %v40, %v42
    %v1070 = vsub.f32 %v1066, %v1068
    %v1071 = vsub.f32 %v1067, %v1069
    %v1072 = vadd.f32 %v1031, 1.0
    %v1073 = vlog2.pop %v1072
    %v1074 = vmul.f32 %v1073, 0.6931472
    %v1075 = vmul.f32 -0.5, %v1031
    %v1076 = vadd.f32 %v1075, 1.0
    %v1077 = vmul.f32 %v1076, %v1031
    %v1078 = vand.u32 2147483647, %v1031
    %vm1079 = vcmp.lt.f32.partialorder %v1078, 0.0004427343
    %v1080 = vsel %vm1079, %v1077, %v1074
    %v1081 = vadd.f32 %v1033, 1.0
    %v1082 = vlog2.pop %v1081
    %v1083 = vmul.f32 %v1082, 0.6931472
    %v1084 = vmul.f32 -0.5, %v1033
    %v1085 = vadd.f32 %v1084, 1.0
    %v1086 = vmul.f32 %v1085, %v1033
    %v1087 = vand.u32 2147483647, %v1033
    %vm1088 = vcmp.lt.f32.partialorder %v1087, 0.0004427343
    %v1089 = vsel %vm1088, %v1086, %v1083
    %v1090 = vadd.f32 %v1070, %v1080
    %v1091 = vadd.f32 %v1071, %v1089
    %v1092 = vmul.f32 %v1064, %v1090
    %v1093 = vmul.f32 %v1065, %v1091
    %v1102 = vcombine.low %v809, %v811
    %v1103 = vcombine.low %v880, %v882
    %v1105 = vunpack.c.l.s4 1983009808
    %v1106 = vunpack.c.0.s8 %v1105
    %v1107 = vlaneseq
    %v1108 = vshrl.u32 %v1107, 7
    %v1109 = vsub.s32 %v1106, %v1108
    %v1110 = vrot.slane %v1102, %v1109
    %v1112 = vunpack.c.l.s4 1983009808
    %v1113 = vunpack.c.0.s8 %v1112
    %v1114 = vlaneseq
    %v1115 = vshrl.u32 %v1114, 7
    %v1116 = vsub.s32 %v1113, %v1115
    %v1117 = vrot.slane %v1103, %v1116
    %v1118 = vcombine.low %v1110, %v1117
    %v1119 = vcombine.low %v951, %v953
    %v1120 = vcombine.low %v1022, %v1024
    %v1122 = vunpack.c.l.s4 1983009808
    %v1123 = vunpack.c.0.s8 %v1122
    %v1124 = vlaneseq
    %v1125 = vshrl.u32 %v1124, 7
    %v1126 = vsub.s32 %v1123, %v1125
    %v1127 = vrot.slane %v1119, %v1126
    %v1129 = vunpack.c.l.s4 1983009808
    %v1130 = vunpack.c.0.s8 %v1129
    %v1131 = vlaneseq
    %v1132 = vshrl.u32 %v1131, 7
    %v1133 = vsub.s32 %v1130, %v1132
    %v1134 = vrot.slane %v1120, %v1133
    %v1135 = vcombine.low %v1127, %v1134
    %v1138 = vmul.f32 %v1092, %v1118
    %v1139 = vmul.f32 %v1093, %v1135
    %1140 = vst [vmem:[#allocation7] sm:$0xff] %v1138
    %1141 = vst [vmem:[#allocation7 + $0x8] sm:$0xff] %v1139
    // Predicated region
    $region22: #{tpu_custom_call.1} parent=1 // pred_check
      _
    $region23: #{tpu_custom_call.1} parent=1 // pred_check_branch
      %1143 = sbr.rel (0) target = $region25
    $region24: #{tpu_custom_call.1} parent=1 // pred_region
      %s1145 = ssub.s32 256, 256
      %1146 = vsyncadd [#allocation4], %s1145
      %s1148 = sshll.u32 [#allocation7], 4
      %s1149 = int_to_ptr.vmem [resolvable:$true] %s1148
      %1151 = dma.vmem_to_hbm [thread:$0]  %s1149, 256, %s3, [#allocation4]
    $region25: #{tpu_custom_call.1} parent=1 // pred_fallthru
      _
    // Predicated region
    $region26: #{tpu_custom_call.1} parent=1 // pred_check
      _
    $region27: #{tpu_custom_call.1} parent=1 // pred_check_branch
      %1153 = sbr.rel (0) target = $region29
    $region28: #{tpu_custom_call.1} parent=1 // pred_region
      %1154 = dma.done [#allocation4], 256
    $region29: #{tpu_custom_call.1} parent=1 // pred_fallthru
      _
    %1155 = vsyncpa [#allocation3], 1
    %1156 = vsyncpa [#allocation6], 1
    %1157 = vsyncpa [#allocation4], 1

</llo_original>
